<compile_context>
chip_gen: v7x
topology: tpu7x:2x2x1
jax: 0.10.0
libtpu: 0.0.40
codegen_flags: <defaults>
</compile_context>

<pallas_src>
import math

import jax
import jax.numpy as jnp
from jax.experimental import pallas as pl
from jax.experimental.pallas import tpu as pltpu


def _make_arcface_kernel(s, cos_m, sin_m, mm, threshold):
    def kernel(mask_ref, invn_ref, emb_ref, w_ref, out_ref):
        # --- cos_theta = (emb @ kernel) * (1 / ||col||), clamp(-1, 1) --------
        # MXU matmul in the streaming dtype (bf16 by default), f32 accumulate.
        dot = jnp.dot(emb_ref[...], w_ref[...],
                      preferred_element_type=jnp.float32)          # (tb, tc) f32
        # Fold the per-column L2 normalization into the matmul output
        # (exact f32 inverse norms precomputed outside the kernel).
        cos = jnp.clip(dot * invn_ref[...], -1.0, 1.0)

        # --- arcface margin (all f32, VPU) -----------------------------------
        sin = jnp.sqrt(jnp.maximum(1.0 - cos * cos, 0.0))
        cos_m_theta = cos * cos_m - sin * sin_m
        keep_val = cos - mm
        cos_m_theta = jnp.where((cos - threshold) <= 0.0, keep_val, cos_m_theta)

        # --- replace every column whose id appears in `label` ----------------
        is_target_col = mask_ref[...] != 0                          # (1, tc) bool
        out_ref[...] = jnp.where(is_target_col, cos_m_theta, cos) * s

    return kernel


def arcface_forward(embeddings, label, weight, *, s=64.0, m=0.5,
                    tc=256, tb=256, compute_dtype=jnp.bfloat16):
    """Pallas implementation of Arcface.forward.

    embeddings: (B, E) float
    label:      (B,)   int
    weight:     (E, C) float (un-normalized; per-column L2 norm applied here)
    returns:    (B, C) float32 scaled logits
    """
    B, E = embeddings.shape
    E2, C = weight.shape
    assert E == E2

    tc = min(tc, C)
    assert C % tc == 0, "class count must be a multiple of the column tile"
    tb = min(tb, B)
    assert B % tb == 0, "batch must be a multiple of the batch tile"

    cos_m = math.cos(m)
    sin_m = math.sin(m)
    mm = sin_m * m
    threshold = math.cos(math.pi - m)

    # Exact f32 inverse column norms, folded into the matmul output in-kernel.
    w_f32 = weight.astype(jnp.float32)
    inv_norm = (1.0 / jnp.linalg.norm(w_f32, axis=0, keepdims=True)
                ).astype(jnp.float32)                               # (1, C)

    # Column-membership mask (torch broadcasting quirk), precomputed once.
    col_ids = jnp.arange(C, dtype=jnp.int32)
    is_tgt_col = jnp.any(label.astype(jnp.int32)[:, None] == col_ids[None, :],
                         axis=0).astype(jnp.int32).reshape(1, C)    # (1, C)

    # Stream the big operands in the compute dtype (bf16 by default).
    emb_c = embeddings.astype(compute_dtype)
    w_c = weight.astype(compute_dtype)

    kernel_fn = _make_arcface_kernel(s, cos_m, sin_m, mm, threshold)

    # Rough per-step VMEM working-set estimate (double-buffered streams).
    itemsize = jnp.dtype(compute_dtype).itemsize
    vmem_est = (2 * E * tc * itemsize        # weight column tile (x2 buffers)
                + 2 * tb * tc * 4            # f32 output tile   (x2 buffers)
                + 2 * tb * E * itemsize      # embedding tile    (x2 buffers)
                + 4 * tc * 4 * 2)            # mask + inv_norm tiles
    vmem_limit = int(min(64 * 1024 * 1024,
                         max(2 * vmem_est, 16 * 1024 * 1024)))

    return pl.pallas_call(
        kernel_fn,
        out_shape=jax.ShapeDtypeStruct((B, C), jnp.float32),
        grid_spec=pltpu.PrefetchScalarGridSpec(
            num_scalar_prefetch=0,
            grid=(B // tb, C // tc),
            in_specs=[
                pl.BlockSpec((1, tc), lambda i, j: (0, j)),   # target-col mask
                pl.BlockSpec((1, tc), lambda i, j: (0, j)),   # inv column norms
                pl.BlockSpec((tb, E), lambda i, j: (i, 0)),   # embeddings tile
                pl.BlockSpec((E, tc), lambda i, j: (0, j)),   # weight col tile
            ],
            out_specs=pl.BlockSpec((tb, tc), lambda i, j: (i, j)),
        ),
        compiler_params=pltpu.CompilerParams(
            dimension_semantics=("parallel", "parallel"),
            vmem_limit_bytes=vmem_limit,
        ),
    )(is_tgt_col, inv_norm, emb_c, w_c)


def init_arcface_weight(key, embedding_size, classnum):
    """Deterministic re-implementation of:
       torch.Tensor(E, C).uniform_(-1, 1).renorm_(2, 1, 1e-5).mul_(1e5)
    (leaves every column with unit L2 norm)."""
    w = jax.random.uniform(key, (embedding_size, classnum),
                           dtype=jnp.float32, minval=-1.0, maxval=1.0)
    col_norm = jnp.linalg.norm(w, axis=0, keepdims=True)            # (1, C)
    factor = jnp.where(col_norm > 1e-5, 1e-5 / col_norm, 1.0)
    return w * factor * 1e5


def _reference_forward(embeddings, label, weight, s=64.0, m=0.5):
    """Plain-JAX reference mirroring the PyTorch code (incl. its broadcasting)."""
    cos_m, sin_m = math.cos(m), math.sin(m)
    mm = sin_m * m
    threshold = math.cos(math.pi - m)
    kn = weight / jnp.linalg.norm(weight, axis=0, keepdims=True)
    cos = jnp.clip(embeddings @ kn, -1.0, 1.0)
    sin = jnp.sqrt(1.0 - cos * cos)
    ctm = cos * cos_m - sin * sin_m
    ctm = jnp.where((cos - threshold) <= 0.0, cos - mm, ctm)
    C = weight.shape[1]
    is_tgt_col = jnp.any(label[:, None] == jnp.arange(C)[None, :], axis=0)  # (C,)
    out = jnp.where(is_tgt_col[None, :], ctm, cos) * s
    return out


if __name__ == "__main__":
    # Small shapes consistent with the module (embedding_size, classnum scaled down).
    B, E, C = 8, 64, 512
    s_scale, margin = 64.0, 0.5

    key = jax.random.PRNGKey(0)
    k_emb, k_w, k_lab = jax.random.split(key, 3)

    embeddings = jax.random.normal(k_emb, (B, E), dtype=jnp.float32)
    # L2-normalize embeddings (typical ArcFace usage; keeps cos well inside
    # [-1, 1] so the bf16-vs-f32 comparison is well conditioned).
    embeddings = embeddings / jnp.linalg.norm(embeddings, axis=1, keepdims=True)
    weight = init_arcface_weight(k_w, E, C)
    label = jax.random.randint(k_lab, (B,), 0, C, dtype=jnp.int32)

    out = arcface_forward(embeddings, label, weight,
                          s=s_scale, m=margin, tc=256)
    out = jax.block_until_ready(out)

    ref = _reference_forward(embeddings, label, weight, s=s_scale, m=margin)
    assert out.shape == (B, C)
    # bf16 weight/embedding streaming -> looser tolerance than a pure-f32 path.
    assert jnp.allclose(out, ref, atol=2e-1, rtol=2e-2), "mismatch vs reference"

    print("KERNEL_OK")
</pallas_src>

<mosaic_0001>
module attributes {stable_mosaic.version = 11 : i64} {
  func.func @kernel(%arg0: i32, %arg1: i32, %arg2: memref<1x256xi32, #tpu.memory_space<vmem>>, %arg3: memref<1x256xf32, #tpu.memory_space<vmem>>, %arg4: memref<8x64xbf16, #tpu.memory_space<vmem>>, %arg5: memref<64x256xbf16, #tpu.memory_space<vmem>>, %arg6: memref<8x256xf32, #tpu.memory_space<vmem>>) attributes {dimension_semantics = [#tpu.dimension_semantics<parallel>, #tpu.dimension_semantics<parallel>], iteration_bounds = array<i64: 1, 2>, scalar_prefetch = 0 : i64, scratch_operands = 0 : i64, tpu.core_type = #tpu.core_type<tc>, window_params = [{transform_indices = @transform_0, window_bounds = array<i64: 1, 256>}, {transform_indices = @transform_1, window_bounds = array<i64: 1, 256>}, {transform_indices = @transform_2, window_bounds = array<i64: 8, 64>}, {transform_indices = @transform_3, window_bounds = array<i64: 64, 256>}, {transform_indices = @transform_4, window_bounds = array<i64: 8, 256>}]} {
    %c0 = arith.constant 0 : index
    %c0_0 = arith.constant 0 : index
    %0 = vector.load %arg4[%c0, %c0_0] : memref<8x64xbf16, #tpu.memory_space<vmem>>, vector<8x64xbf16>
    %c0_1 = arith.constant 0 : index
    %c0_2 = arith.constant 0 : index
    %1 = vector.load %arg5[%c0_1, %c0_2] : memref<64x256xbf16, #tpu.memory_space<vmem>>, vector<64x256xbf16>
    %cst = arith.constant dense<0.000000e+00> : vector<8x256xf32>
    %2 = tpu.matmul %0, %1, %cst {dimension_numbers = #tpu.dot_dimension_numbers<[1], [0], [0], [1], [0, 0, 1, 1], [], []>} : vector<8x64xbf16>, vector<64x256xbf16>, vector<8x256xf32> -> vector<8x256xf32>
    %c0_3 = arith.constant 0 : index
    %c0_4 = arith.constant 0 : index
    %3 = vector.load %arg3[%c0_3, %c0_4] : memref<1x256xf32, #tpu.memory_space<vmem>>, vector<1x256xf32>
    %4 = vector.broadcast %3 : vector<1x256xf32> to vector<8x256xf32>
    %5 = arith.mulf %2, %4 : vector<8x256xf32>
    %cst_5 = arith.constant -1.000000e+00 : f32
    %cst_6 = arith.constant 1.000000e+00 : f32
    %6 = vector.broadcast %cst_5 : f32 to vector<8x256xf32>
    %7 = arith.maximumf %6, %5 : vector<8x256xf32>
    %8 = vector.broadcast %cst_6 : f32 to vector<8x256xf32>
    %9 = arith.minimumf %8, %7 : vector<8x256xf32>
    %10 = arith.mulf %9, %9 : vector<8x256xf32>
    %cst_7 = arith.constant 1.000000e+00 : f32
    %11 = vector.broadcast %cst_7 : f32 to vector<8x256xf32>
    %12 = arith.subf %11, %10 : vector<8x256xf32>
    %cst_8 = arith.constant 0.000000e+00 : f32
    %13 = vector.broadcast %cst_8 : f32 to vector<8x256xf32>
    %14 = arith.maximumf %12, %13 : vector<8x256xf32>
    %15 = math.sqrt %14 : vector<8x256xf32>
    %cst_9 = arith.constant 0.87758255 : f32
    %16 = vector.broadcast %cst_9 : f32 to vector<8x256xf32>
    %17 = arith.mulf %9, %16 : vector<8x256xf32>
    %cst_10 = arith.constant 0.47942555 : f32
    %18 = vector.broadcast %cst_10 : f32 to vector<8x256xf32>
    %19 = arith.mulf %15, %18 : vector<8x256xf32>
    %20 = arith.subf %17, %19 : vector<8x256xf32>
    %cst_11 = arith.constant 0.239712775 : f32
    %21 = vector.broadcast %cst_11 : f32 to vector<8x256xf32>
    %22 = arith.subf %9, %21 : vector<8x256xf32>
    %cst_12 = arith.constant -0.87758255 : f32
    %23 = vector.broadcast %cst_12 : f32 to vector<8x256xf32>
    %24 = arith.subf %9, %23 : vector<8x256xf32>
    %cst_13 = arith.constant 0.000000e+00 : f32
    %25 = vector.broadcast %cst_13 : f32 to vector<8x256xf32>
    %26 = arith.cmpf ole, %24, %25 : vector<8x256xf32>
    %27 = arith.select %26, %22, %20 : vector<8x256xi1>, vector<8x256xf32>
    %c0_14 = arith.constant 0 : index
    %c0_15 = arith.constant 0 : index
    %28 = vector.load %arg2[%c0_14, %c0_15] : memref<1x256xi32, #tpu.memory_space<vmem>>, vector<1x256xi32>
    %c0_i32 = arith.constant 0 : i32
    %29 = vector.broadcast %c0_i32 : i32 to vector<1x256xi32>
    %30 = arith.cmpi ne, %28, %29 : vector<1x256xi32>
    %31 = vector.shape_cast %30 : vector<1x256xi1> to vector<1x256xi1>
    %32 = vector.broadcast %31 : vector<1x256xi1> to vector<8x256xi1>
    %33 = arith.select %32, %27, %9 : vector<8x256xi1>, vector<8x256xf32>
    %cst_16 = arith.constant 6.400000e+01 : f32
    %34 = vector.broadcast %cst_16 : f32 to vector<8x256xf32>
    %35 = arith.mulf %33, %34 : vector<8x256xf32>
    %c0_17 = arith.constant 0 : index
    %c0_18 = arith.constant 0 : index
    %36 = vector.load %arg6[%c0_17, %c0_18] : memref<8x256xf32, #tpu.memory_space<vmem>>, vector<8x256xf32>
    tpu.vector_store %arg6[%c0_17, %c0_18], %35 {strides = array<i32>} : memref<8x256xf32, #tpu.memory_space<vmem>>, vector<8x256xf32>,
    return
  }
  func.func @transform_0(%arg0: i32, %arg1: i32) -> (i32, i32) {
    %c0_i32 = arith.constant 0 : i32
    %c0_i32_0 = arith.constant 0 : i32
    return %c0_i32, %arg1 : i32, i32
  }
  func.func @transform_1(%arg0: i32, %arg1: i32) -> (i32, i32) {
    %c0_i32 = arith.constant 0 : i32
    %c0_i32_0 = arith.constant 0 : i32
    return %c0_i32, %arg1 : i32, i32
  }
  func.func @transform_2(%arg0: i32, %arg1: i32) -> (i32, i32) {
    %c0_i32 = arith.constant 0 : i32
    %c0_i32_0 = arith.constant 0 : i32
    return %arg0, %c0_i32 : i32, i32
  }
  func.func @transform_3(%arg0: i32, %arg1: i32) -> (i32, i32) {
    %c0_i32 = arith.constant 0 : i32
    %c0_i32_0 = arith.constant 0 : i32
    return %c0_i32, %arg1 : i32, i32
  }
  func.func @transform_4(%arg0: i32, %arg1: i32) -> (i32, i32) {
    %c0_i32 = arith.constant 0 : i32
    return %arg0, %arg1 : i32, i32
  }
}

</mosaic_0001>

<llo_original>
// kernel: tpu_custom_call.1
$region0: #{tpu_custom_call.1}
  #allocation0 [shape = 'u32[]', space=smem, size = 0x4, offset = 0x4, fixed_abs, tag = 'smem constant byte address 0x4 - core index']
  #allocation1 [shape = 'u32[144,128]{1,0:T(1,128)}', space=vmem, size = 0x12000, scoped, tag = 'internal scratch']
  %s0 = inlined_call_operand.hbm [shape: s32[1,512], index: 0, kind: input, shape index: {}]
  %s1 = inlined_call_operand.hbm [shape: f32[1,512], index: 1, kind: input, shape index: {}]
  %s2 = inlined_call_operand.vmem [shape: bf16[8,64], index: 2, kind: input, shape index: {}]
  %s3 = inlined_call_operand.hbm [shape: bf16[64,512], index: 3, kind: input, shape index: {}]
  %s4 = inlined_call_operand.hbm [shape: f32[8,512], index: 4, kind: output, shape index: {}]
  %s5 = sld [smem:[#allocation0]]
  $region61: #{tpu_custom_call.1} parent=0
    _
  %s7 = ssub.s32 1, %s5
  %s8 = scalar_select 0, %s7, %s5
  $region1: #{tpu_custom_call.1} parent=0
    #allocation2 [shape = 'u8[2048]{0}', space=vmem, size = 0x800, scoped, tag = 'input window, operand 0']
    #allocation3 [shape = 's32[2]{0}', space=sflag, size = 0x8, scoped, tag = 'scoped memory for tpu_custom_call.1']
    #allocation4 [shape = 's32[2]{0}', space=sflag, size = 0x8, scoped, tag = 'scoped memory for tpu_custom_call.1']
    #allocation5 [shape = 'u8[2048]{0}', space=vmem, size = 0x800, scoped, tag = 'input window, operand 1']
    #allocation6 [shape = 's32[2]{0}', space=sflag, size = 0x8, scoped, tag = 'scoped memory for tpu_custom_call.1']
    #allocation7 [shape = 'u8[65536]{0}', space=vmem, size = 0x10000, scoped, tag = 'input window, operand 3']
    #allocation8 [shape = 'u8[16384]{0}', space=vmem, size = 0x4000, scoped, tag = 'output window, operand 0']
    %9 = vsyncpa [#allocation3], 0
    %s10 = scalar_lea.sflag [#allocation3], 1
    %11 = vsyncpa %s10, 0
    %12 = vsyncpa [#allocation6], 0
    %s13 = scalar_lea.sflag [#allocation6], 1
    %14 = vsyncpa %s13, 0
    %15 = vsyncpa [#allocation4], 0
    %s16 = scalar_lea.sflag [#allocation4], 1
    %17 = vsyncpa %s16, 0
    loop: start=0, step=1, limit=4
    $region2: #{tpu_custom_call.1} parent=1 // loop_pre_header
      _
    $region3: #{tpu_custom_call.1} parent=1 // loop_header
      %s19 = sphi 0, %s23
      %p20 = scmp.ge.s32.totalorder %s19, 4
      %s26 = sphi 0, %s38
      %s27 = sphi 0, %s34
      %s28 = sphi 0, %s26
      %s29 = sphi 0, %s27
      %s30 = sphi 0, %s28
      %s31 = sphi 0, %s29
      %s41 = sphi 0, %s43
      %s44 = sphi 0, %s41
      %s45 = sphi 0, %s44
      %s61 = sphi 0, %s45
      %s67 = sphi 0, %s69
      %s70 = sphi 0, %s67
      %s71 = sphi 0, %s70
      %s87 = sphi 0, %s71
      %s93 = sphi 0, %s95
      %s96 = sphi 0, %s93
      %s97 = sphi 0, %s96
      %s113 = sphi 0, %s97
      %s119 = sphi 0, %s121
      %s122 = sphi 0, %s119
      %s123 = sphi 0, %s122
      %s139 = sphi 0, %s123
      %s147 = sphi 0, %s149
      %s150 = sphi 0, %s147
      %s151 = sphi 0, %s150
      %s167 = sphi 0, %s151
    $region4: #{tpu_custom_call.1} parent=1 // loop_header_branch
      %22 = sbr.rel (%p20) target = $region8
    $region5: #{tpu_custom_call.1} parent=1 // loop_body
      %s24 = ssub.s32 %s19, 1
      %s25 = ssub.s32 %s19, 2
      %s32 = sadd.s32 1, %s27
      %p33 = scmp.ge.s32.totalorder %s32, 2
      %s34 = scalar_select %p33, 0, %s32
      %s35 = sadd.s32 1, %s26
      %s36 = scalar_select %p33, %s35, %s26
      %p37 = scmp.ge.s32.totalorder %s36, 1
      %s38 = scalar_select %p37, 0, %s36
      %s39 = ssub.s32 %s27, %s34
      %p40 = scmp.eq.s32.totalorder %s39, 0
      %s42 = sadd.s32 %s41, 1
      %s43 = scalar_select %p40, %s41, %s42
      %p46 = pneg %p40
      %p47 = scmp.eq.s32.totalorder %s19, 1
      %p48 = por %p46, %p47
      %p49 = scmp.ne.s32.totalorder %s41, %s44
      %p50 = scmp.eq.s32.totalorder %s19, 0
      %p51 = por %p49, %p50
      %p52 = scmp.ne.s32.totalorder %s41, %s44
      %p53 = scmp.eq.s32.totalorder %s24, 1
      %p54 = por %p52, %p53
      %p55 = scmp.ne.s32.totalorder %s44, %s45
      %p56 = scmp.eq.s32.totalorder %s24, 0
      %p57 = por %p55, %p56
      %p58 = scmp.ne.s32.totalorder %s44, %s45
      %p59 = scmp.eq.s32.totalorder %s25, 1
      %p60 = por %p58, %p59
      %p62 = scmp.ne.s32.totalorder %s45, %s61
      %p63 = scmp.eq.s32.totalorder %s25, 0
      %p64 = por %p62, %p63
      %s65 = ssub.s32 %s27, %s34
      %p66 = scmp.eq.s32.totalorder %s65, 0
      %s68 = sadd.s32 %s67, 1
      %s69 = scalar_select %p66, %s67, %s68
      %p72 = pneg %p66
      %p73 = scmp.eq.s32.totalorder %s19, 1
      %p74 = por %p72, %p73
      %p75 = scmp.ne.s32.totalorder %s67, %s70
      %p76 = scmp.eq.s32.totalorder %s19, 0
      %p77 = por %p75, %p76
      %p78 = scmp.ne.s32.totalorder %s67, %s70
      %p79 = scmp.eq.s32.totalorder %s24, 1
      %p80 = por %p78, %p79
      %p81 = scmp.ne.s32.totalorder %s70, %s71
      %p82 = scmp.eq.s32.totalorder %s24, 0
      %p83 = por %p81, %p82
      %p84 = scmp.ne.s32.totalorder %s70, %s71
      %p85 = scmp.eq.s32.totalorder %s25, 1
      %p86 = por %p84, %p85
      %p88 = scmp.ne.s32.totalorder %s71, %s87
      %p89 = scmp.eq.s32.totalorder %s25, 0
      %p90 = por %p88, %p89
      %s91 = ssub.s32 %s26, %s38
      %p92 = scmp.eq.s32.totalorder %s91, 0
      %s94 = sadd.s32 %s93, 1
      %s95 = scalar_select %p92, %s93, %s94
      %p98 = pneg %p92
      %p99 = scmp.eq.s32.totalorder %s19, 1
      %p100 = por %p98, %p99
      %p101 = scmp.ne.s32.totalorder %s93, %s96
      %p102 = scmp.eq.s32.totalorder %s19, 0
      %p103 = por %p101, %p102
      %p104 = scmp.ne.s32.totalorder %s93, %s96
      %p105 = scmp.eq.s32.totalorder %s24, 1
      %p106 = por %p104, %p105
      %p107 = scmp.ne.s32.totalorder %s96, %s97
      %p108 = scmp.eq.s32.totalorder %s24, 0
      %p109 = por %p107, %p108
      %p110 = scmp.ne.s32.totalorder %s96, %s97
      %p111 = scmp.eq.s32.totalorder %s25, 1
      %p112 = por %p110, %p111
      %p114 = scmp.ne.s32.totalorder %s97, %s113
      %p115 = scmp.eq.s32.totalorder %s25, 0
      %p116 = por %p114, %p115
      %s117 = ssub.s32 %s27, %s34
      %p118 = scmp.eq.s32.totalorder %s117, 0
      %s120 = sadd.s32 %s119, 1
      %s121 = scalar_select %p118, %s119, %s120
      %p124 = pneg %p118
      %p125 = scmp.eq.s32.totalorder %s19, 1
      %p126 = por %p124, %p125
      %p127 = scmp.ne.s32.totalorder %s119, %s122
      %p128 = scmp.eq.s32.totalorder %s19, 0
      %p129 = por %p127, %p128
      %p130 = scmp.ne.s32.totalorder %s119, %s122
      %p131 = scmp.eq.s32.totalorder %s24, 1
      %p132 = por %p130, %p131
      %p133 = scmp.ne.s32.totalorder %s122, %s123
      %p134 = scmp.eq.s32.totalorder %s24, 0
      %p135 = por %p133, %p134
      %p136 = scmp.ne.s32.totalorder %s122, %s123
      %p137 = scmp.eq.s32.totalorder %s25, 1
      %p138 = por %p136, %p137
      %p140 = scmp.ne.s32.totalorder %s123, %s139
      %p141 = scmp.eq.s32.totalorder %s25, 0
      %p142 = por %p140, %p141
      %s143 = ssub.s32 %s26, %s38
      %s144 = ssub.s32 %s27, %s34
      %s145 = sor.u32 %s143, %s144
      %p146 = scmp.eq.s32.totalorder %s145, 0
      %s148 = sadd.s32 %s147, 1
      %s149 = scalar_select %p146, %s147, %s148
      %p152 = pneg %p146
      %p153 = scmp.eq.s32.totalorder %s19, 1
      %p154 = por %p152, %p153
      %p155 = scmp.ne.s32.totalorder %s147, %s150
      %p156 = scmp.eq.s32.totalorder %s19, 0
      %p157 = por %p155, %p156
      %p158 = scmp.ne.s32.totalorder %s147, %s150
      %p159 = scmp.eq.s32.totalorder %s24, 1
      %p160 = por %p158, %p159
      %p161 = scmp.ne.s32.totalorder %s150, %s151
      %p162 = scmp.eq.s32.totalorder %s24, 0
      %p163 = por %p161, %p162
      %p164 = scmp.ne.s32.totalorder %s150, %s151
      %p165 = scmp.eq.s32.totalorder %s25, 1
      %p166 = por %p164, %p165
      %p168 = scmp.ne.s32.totalorder %s151, %s167
      %p169 = scmp.eq.s32.totalorder %s25, 0
      %p170 = por %p168, %p169
      %p171 = scmp.le.s32.totalorder 1, %s19
      %p172 = scmp.lt.s32.totalorder %s19, 3
      %p173 = pnand %p171, %p172
      %p174 = pneg %p173
      // Predicated region
      $region9: #{tpu_custom_call.1} parent=5 // pred_check
        _
      $region10: #{tpu_custom_call.1} parent=5 // pred_check_branch
        %176 = sbr.rel (%p173) target = $region12
      $region11: #{tpu_custom_call.1} parent=5 // pred_region
        %s177 = ssub.s32 %s19, 1
        // Predicated region
        $region13: #{tpu_custom_call.1} parent=11 // pred_check
          %p178 = pneg %p109
        $region14: #{tpu_custom_call.1} parent=11 // pred_check_branch
          %180 = sbr.rel (%p178) target = $region16
        $region15: #{tpu_custom_call.1} parent=11 // pred_region
          %p181 = scmp.lt.s32.totalorder %s28, 0
          %s182 = scalar_select %p181, %s28, 0
          %s183 = smul.addr %s182, 4
          %s184 = scalar_lea.vmem %s2, %s183
        $region16: #{tpu_custom_call.1} parent=11 // pred_fallthru
          _
      $region12: #{tpu_custom_call.1} parent=5 // pred_fallthru
        _
      %p185 = scmp.lt.s32.totalorder %s19, 2
      // Predicated region
      $region17: #{tpu_custom_call.1} parent=5 // pred_check
        %p186 = pneg %p185
      $region18: #{tpu_custom_call.1} parent=5 // pred_check_branch
        %188 = sbr.rel (%p186) target = $region20
      $region19: #{tpu_custom_call.1} parent=5 // pred_region
        // Predicated region
        $region21: #{tpu_custom_call.1} parent=19 // pred_check
          %p189 = pneg %p51
        $region22: #{tpu_custom_call.1} parent=19 // pred_check_branch
          %191 = sbr.rel (%p189) target = $region24
        $region23: #{tpu_custom_call.1} parent=19 // pred_region
          %s192 = sand.u32 %s41, 1
          %s193 = scalar_lea.sflag [#allocation3], %s192
          %s194 = sand.u32 %s41, 1
          %s195 = smul.addr %s194, 2
          %s196 = scalar_lea.vmem [#allocation2], %s195
          %s197 = smul.u32 2, %s27
          %s199 = ssub.s32 32, 32
          %200 = vsyncadd %s193, %s199
          %s201 = smul.addr %s197, 16
          %s202 = scalar_lea.hbm %s0, %s201
          %s204 = sshll.u32 %s196, 4
          %s205 = int_to_ptr.vmem [resolvable:$true] %s204
          %207 = dma.hbm_to_vmem [thread:$0]  %s202, 32, %s205, %s193
        $region24: #{tpu_custom_call.1} parent=19 // pred_fallthru
          _
        // Predicated region
        $region25: #{tpu_custom_call.1} parent=19 // pred_check
          %p208 = pneg %p77
        $region26: #{tpu_custom_call.1} parent=19 // pred_check_branch
          %210 = sbr.rel (%p208) target = $region28
        $region27: #{tpu_custom_call.1} parent=19 // pred_region
          %s211 = sand.u32 %s19, 1
          %s212 = scalar_lea.sflag [#allocation6], %s211
          %s213 = sand.u32 %s67, 1
          %s214 = smul.addr %s213, 2
          %s215 = scalar_lea.vmem [#allocation5], %s214
          %s216 = smul.u32 2, %s27
          %s218 = ssub.s32 32, 32
          %219 = vsyncadd %s212, %s218
          %s220 = smul.addr %s216, 16
          %s221 = scalar_lea.hbm %s1, %s220
          %s223 = sshll.u32 %s215, 4
          %s224 = int_to_ptr.vmem [resolvable:$true] %s223
          %226 = dma.hbm_to_vmem [thread:$0]  %s221, 32, %s224, %s212
        $region28: #{tpu_custom_call.1} parent=19 // pred_fallthru
          _
        // Predicated region
        $region29: #{tpu_custom_call.1} parent=19 // pred_check
          %p227 = pneg %p129
        $region30: #{tpu_custom_call.1} parent=19 // pred_check_branch
          %229 = sbr.rel (%p227) target = $region32
        $region31: #{tpu_custom_call.1} parent=19 // pred_region
          %s230 = sand.u32 %s19, 1
          %s231 = scalar_lea.sflag [#allocation6], %s230
          %s232 = sand.u32 %s119, 1
          %s233 = smul.addr %s232, 64
          %s234 = scalar_lea.vmem [#allocation7], %s233
          %s235 = smul.u32 2, %s27
          %s237 = ssub.s32 1024, 1024
          %238 = vsyncadd %s231, %s237
          %s239 = smul.addr %s235, 64
          %s240 = scalar_lea.hbm %s3, %s239
          %s241 = sshll.u32 %s234, 4
          %s242 = int_to_ptr.vmem [resolvable:$true] %s241
          %247 = dma.hbm_to_vmem [thread:$0]  %s240, 1024, %s242, %s231, 256, 128, 8
        $region32: #{tpu_custom_call.1} parent=19 // pred_fallthru
          _
      $region20: #{tpu_custom_call.1} parent=5 // pred_fallthru
        _
      %p248 = scmp.le.s32.totalorder 1, %s19
      %p249 = scmp.lt.s32.totalorder %s19, 3
      %p250 = pnand %p248, %p249
      %p251 = pneg %p250
      // Predicated region
      $region33: #{tpu_custom_call.1} parent=5 // pred_check
        _
      $region34: #{tpu_custom_call.1} parent=5 // pred_check_branch
        %253 = sbr.rel (%p250) target = $region36
      $region35: #{tpu_custom_call.1} parent=5 // pred_region
        %s254 = ssub.s32 %s19, 1
        %s255 = sand.u32 %s44, 1
        %s256 = scalar_lea.sflag [#allocation3], %s255
        %s257 = sand.u32 %s44, 1
        %s258 = smul.addr %s257, 2
        %s259 = scalar_lea.vmem [#allocation2], %s258
        // Predicated region
        $region37: #{tpu_custom_call.1} parent=35 // pred_check
          %p260 = pneg %p57
        $region38: #{tpu_custom_call.1} parent=35 // pred_check_branch
          %262 = sbr.rel (%p260) target = $region40
        $region39: #{tpu_custom_call.1} parent=35 // pred_region
          %263 = dma.done %s256, 32
        $region40: #{tpu_custom_call.1} parent=35 // pred_fallthru
          _
        %s264 = sand.u32 %s24, 1
        %s265 = scalar_lea.sflag [#allocation6], %s264
        %s266 = sand.u32 %s70, 1
        %s267 = smul.addr %s266, 2
        %s268 = scalar_lea.vmem [#allocation5], %s267
        // Predicated region
        $region41: #{tpu_custom_call.1} parent=35 // pred_check
          %p269 = pneg %p83
        $region42: #{tpu_custom_call.1} parent=35 // pred_check_branch
          %271 = sbr.rel (%p269) target = $region44
        $region43: #{tpu_custom_call.1} parent=35 // pred_region
          %272 = dma.done %s265, 32
        $region44: #{tpu_custom_call.1} parent=35 // pred_fallthru
          _
        %s273 = sand.u32 %s24, 1
        %s274 = scalar_lea.sflag [#allocation6], %s273
        %s275 = sand.u32 %s122, 1
        %s276 = smul.addr %s275, 64
        %s277 = scalar_lea.vmem [#allocation7], %s276
        // Predicated region
        $region45: #{tpu_custom_call.1} parent=35 // pred_check
          %p278 = pneg %p135
        $region46: #{tpu_custom_call.1} parent=35 // pred_check_branch
          %280 = sbr.rel (%p278) target = $region48
        $region47: #{tpu_custom_call.1} parent=35 // pred_region
          %281 = dma.done %s274, 1024
        $region48: #{tpu_custom_call.1} parent=35 // pred_fallthru
          _
        %s282 = sand.u32 %s44, 1
        %s283 = scalar_lea.sflag [#allocation3], %s282
        %s284 = sand.u32 %s44, 1
        %s285 = smul.addr %s284, 2
        %s286 = scalar_lea.vmem [#allocation2], %s285
        %p287 = pneg %p57
        %p288 = pneg %p54
        %s289 = sand.u32 %s24, 1
        %s290 = scalar_lea.sflag [#allocation6], %s289
        %s291 = sand.u32 %s70, 1
        %s292 = smul.addr %s291, 2
        %s293 = scalar_lea.vmem [#allocation5], %s292
        %p294 = pneg %p83
        %p295 = pneg %p80
        %p296 = scmp.lt.s32.totalorder %s28, 0
        %s297 = scalar_select %p296, %s28, 0
        %s298 = smul.addr %s297, 4
        %s299 = scalar_lea.vmem %s2, %s298
        %p300 = pneg %p109
        %p301 = pneg %p106
        %s302 = sand.u32 %s24, 1
        %s303 = scalar_lea.sflag [#allocation6], %s302
        %s304 = sand.u32 %s122, 1
        %s305 = smul.addr %s304, 64
        %s306 = scalar_lea.vmem [#allocation7], %s305
        %p307 = pneg %p135
        %p308 = pneg %p132
        %p309 = pneg %p163
        %p310 = pneg %p160
        %s311 = sand.u32 %s150, 1
        %s312 = scalar_lea.sflag [#allocation4], %s311
        %s313 = sand.u32 %s150, 1
        %s314 = smul.addr %s313, 16
        %s315 = scalar_lea.vmem [#allocation8], %s314
        %s316 = smul.u32 2, %s29
        %s317 = smul.u32 2, %s29
        %p318 = scmp.lt.s32.totalorder %s28, 0
        %s319 = scalar_select %p318, %s28, 0
        %s320 = smul.addr %s319, 4
        %s321 = scalar_lea.vmem %s2, %s320
        %s322 = smul.u32 2, %s29
        %s323 = smul.u32 2, %s29
        %v325 = vld [vmem:[%s321] sm:$0xf]
        %v326 = vld [vmem:[%s277] sm:$0xff]
        %v327 = vld [vmem:[%s277 + $0x8] sm:$0xff]
        %v328 = vld [vmem:[%s277 + $0x10] sm:$0xff]
        %v329 = vld [vmem:[%s277 + $0x18] sm:$0xff]
        %v330 = vld [vmem:[%s277 + $0x20] sm:$0xff]
        %v331 = vld [vmem:[%s277 + $0x28] sm:$0xff]
        %v332 = vld [vmem:[%s277 + $0x30] sm:$0xff]
        %v333 = vld [vmem:[%s277 + $0x38] sm:$0xff]
        %v342 = vunpack.c.l.b16 %v326
        %v343 = vunpack.c.h.b16 %v326
        %v344 = vunpack.c.l.b16 %v327
        %v345 = vunpack.c.h.b16 %v327
        %v346 = vunpack.c.l.b16 %v328
        %v347 = vunpack.c.h.b16 %v328
        %v348 = vunpack.c.l.b16 %v329
        %v349 = vunpack.c.h.b16 %v329
        %v350 = vunpack.c.l.b16 %v330
        %v351 = vunpack.c.h.b16 %v330
        %v352 = vunpack.c.l.b16 %v331
        %v353 = vunpack.c.h.b16 %v331
        %v354 = vunpack.c.l.b16 %v332
        %v355 = vunpack.c.h.b16 %v332
        %v356 = vunpack.c.l.b16 %v333
        %v357 = vunpack.c.h.b16 %v333
        %v358 = vpack.c.b16 %v344, %v342
        %v359 = vpack.c.b16 %v345, %v343
        %v360 = vpack.c.b16 %v348, %v346
        %v361 = vpack.c.b16 %v349, %v347
        %v362 = vpack.c.b16 %v352, %v350
        %v363 = vpack.c.b16 %v353, %v351
        %v364 = vpack.c.b16 %v356, %v354
        %v365 = vpack.c.b16 %v357, %v355
        %vm374 = vcmask 523264
        %v376 = vsel %vm374, %v325, 0
        %378 = vmatprep.subr.bf16.mxu0 %v359
        %379 = vmatpush1.bf16.msra.mxu0 %v358
        %380 = vmatprep.subr.bf16.mxu0 %v361
        %381 = vmatpush1.bf16.msra.mxu0 %v360
        %382 = vmatprep.subr.bf16.mxu0 %v363
        %383 = vmatpush1.bf16.msra.mxu0 %v362
        %384 = vmatprep.subr.bf16.mxu0 %v365
        %385 = vmatpush1.bf16.msra.mxu0 %v364
        %386 = vmatprep.subr.bf16.mxu0 0
        %387 = vmatpush1.bf16.msra.mxu0 0
        %388 = vmatprep.subr.bf16.mxu0 0
        %389 = vmatpush1.bf16.msra.mxu0 0
        %390 = vmatprep.subr.bf16.mxu0 0
        %391 = vmatpush1.bf16.msra.mxu0 0
        %392 = vmatprep.subr.bf16.mxu0 0
        %393 = vmatpush1.bf16.msra.mxu0 0
        %394 = vmatprep.subr.bf16.mxu0 0
        %395 = vmatpush1.bf16.msra.mxu0 0
        %396 = vmatprep.subr.bf16.mxu0 0
        %397 = vmatpush1.bf16.msra.mxu0 0
        %398 = vmatprep.subr.bf16.mxu0 0
        %399 = vmatpush1.bf16.msra.mxu0 0
        %400 = vmatprep.subr.bf16.mxu0 0
        %401 = vmatpush1.bf16.msra.mxu0 0
        %402 = vmatprep.subr.bf16.mxu0 0
        %403 = vmatpush1.bf16.msra.mxu0 0
        %404 = vmatprep.subr.bf16.mxu0 0
        %405 = vmatpush1.bf16.msra.mxu0 0
        %406 = vmatprep.subr.bf16.mxu0 0
        %407 = vmatpush1.bf16.msra.mxu0 0
        %408 = vmatprep.subr.bf16.mxu0 0
        %409 = vmatpush1.bf16.msra.mxu0 0
        %410 = vmatprep.mubr.bf16.mxu0 0
        %411 = vmatmul.mubr.bf16.gmra.mrb[0].mxu0 %v376
        %v412 = vpop.f32.mrb[0].mxu0
        %v413 = vadd.f32 0.0, %v412
        %v414 = vpop.f32.mrb[0].mxu0
        %v415 = vadd.f32 0.0, %v414
        %v416 = vpop.f32.mrb[0].mxu0
        %v417 = vpop.f32.mrb[0].mxu0
        %418 = vdwg.mxu0
        %v419 = vld [vmem:[%s268] sm:$0x3]
        %v421 = vlaneseq
        %v422 = vshrl.u32 %v421, 7
        %v423 = vsub.s32 0, %v422
        %v424 = vrot.slane %v419, %v423
        %v425 = vlaneseq
        %v426 = vshrl.u32 %v425, 7
        %v427 = vsub.s32 1, %v426
        %v428 = vrot.slane %v419, %v427
        %v431 = vmul.f32 %v413, %v424
        %v432 = vmul.f32 %v415, %v428
        %v433 = vmax.f32 %v431, -1.0
        %v434 = vmax.f32 %v432, -1.0
        %v435 = vmin.f32 %v433, 1.0
        %v436 = vmin.f32 %v434, 1.0
        %v437 = vmul.f32 %v435, %v435
        %v438 = vmul.f32 %v436, %v436
        %v439 = vsub.f32 1.0, %v437
        %v440 = vsub.f32 1.0, %v438
        %v441 = vmax.f32 %v439, 0.0
        %v442 = vmax.f32 %v440, 0.0
        %v443 = vrsqrt.pop %v441
        %v444 = vmul.f32 %v441, %v443
        %vm445 = vcmp.eq.f32.partialorder %v441, inf
        %v446 = vsel %vm445, %v441, %v444
        %vm447 = vcmp.eq.f32.partialorder %v441, 0.0
        %v448 = vand.u32 %v441, 2147483648
        %v449 = vsel %vm447, %v448, %v446
        %v450 = vrsqrt.pop %v442
        %v451 = vmul.f32 %v442, %v450
        %vm452 = vcmp.eq.f32.partialorder %v442, inf
        %v453 = vsel %vm452, %v442, %v451
        %vm454 = vcmp.eq.f32.partialorder %v442, 0.0
        %v455 = vand.u32 %v442, 2147483648
        %v456 = vsel %vm454, %v455, %v453
        %v457 = vmul.f32 %v435, 0.87758255
        %v458 = vmul.f32 %v436, 0.87758255
        %v459 = vmul.f32 %v449, 0.47942555
        %v460 = vmul.f32 %v456, 0.47942555
        %v461 = vsub.f32 %v457, %v459
        %v462 = vsub.f32 %v458, %v460
        %v463 = vsub.f32 %v435, 0.23971277
        %v464 = vsub.f32 %v436, 0.23971277
        %v465 = vsub.f32 %v435, -0.87758255
        %v466 = vsub.f32 %v436, -0.87758255
        %vm467 = vcmp.le.f32.partialorder %v465, 0.0
        %vm468 = vcmp.le.f32.partialorder %v466, 0.0
        %v469 = vsel %vm467, %v463, %v461
        %v470 = vsel %vm468, %v464, %v462
        %v471 = vld [vmem:[%s259] sm:$0x3]
        %vm472 = vcmp.ne.s32.totalorder %v471, 0
        %v473 = vsel %vm472, 1, 0
        %v474 = vlaneseq
        %v475 = vshrl.u32 %v474, 7
        %v476 = vsub.s32 0, %v475
        %v477 = vrot.slane %v473, %v476
        %v478 = vlaneseq
        %v479 = vshrl.u32 %v478, 7
        %v480 = vsub.s32 1, %v479
        %v481 = vrot.slane %v473, %v480
        %vm482 = vcmp.eq.s32.totalorder %v477, 1
        %vm483 = vcmp.eq.s32.totalorder %v481, 1
        %v484 = vsel %vm482, %v469, %v435
        %v485 = vsel %vm483, %v470, %v436
        %v486 = vmul.f32 %v484, 64.0
        %v487 = vmul.f32 %v485, 64.0
        %488 = vst [vmem:[%s315] sm:$0xff] %v486
        %489 = vst [vmem:[%s315 + $0x8] sm:$0xff] %v487
        %s490 = sand.u32 %s150, 1
        %s491 = scalar_lea.sflag [#allocation4], %s490
        %s492 = sand.u32 %s150, 1
        %s493 = smul.addr %s492, 16
        %s494 = scalar_lea.vmem [#allocation8], %s493
        // Predicated region
        $region49: #{tpu_custom_call.1} parent=35 // pred_check
          %p495 = pneg %p160
        $region50: #{tpu_custom_call.1} parent=35 // pred_check_branch
          %497 = sbr.rel (%p495) target = $region52
        $region51: #{tpu_custom_call.1} parent=35 // pred_region
          %s498 = smul.u32 2, %s29
          %s500 = ssub.s32 256, 256
          %501 = vsyncadd %s491, %s500
          %s502 = smul.addr %s28, 4
          %s503 = sadd.s32 %s498, %s502
          %s504 = smul.addr %s503, 128
          %s505 = scalar_lea.hbm %s4, %s504
          %s507 = sshll.u32 %s494, 4
          %s508 = int_to_ptr.vmem [resolvable:$true] %s507
          %510 = dma.vmem_to_hbm [thread:$0]  %s508, 256, %s505, %s491
        $region52: #{tpu_custom_call.1} parent=35 // pred_fallthru
          _
      $region36: #{tpu_custom_call.1} parent=5 // pred_fallthru
        _
      %p511 = scmp.le.s32.totalorder 2, %s19
      // Predicated region
      $region53: #{tpu_custom_call.1} parent=5 // pred_check
        %p512 = pneg %p511
      $region54: #{tpu_custom_call.1} parent=5 // pred_check_branch
        %514 = sbr.rel (%p512) target = $region56
      $region55: #{tpu_custom_call.1} parent=5 // pred_region
        %s515 = ssub.s32 %s19, 2
        // Predicated region
        $region57: #{tpu_custom_call.1} parent=55 // pred_check
          %p516 = pneg %p166
        $region58: #{tpu_custom_call.1} parent=55 // pred_check_branch
          %518 = sbr.rel (%p516) target = $region60
        $region59: #{tpu_custom_call.1} parent=55 // pred_region
          %s519 = sand.u32 %s151, 1
          %s520 = scalar_lea.sflag [#allocation4], %s519
          %s521 = sand.u32 %s151, 1
          %s522 = smul.addr %s521, 16
          %s523 = scalar_lea.vmem [#allocation8], %s522
          %524 = dma.done %s520, 256
        $region60: #{tpu_custom_call.1} parent=55 // pred_fallthru
          _
      $region56: #{tpu_custom_call.1} parent=5 // pred_fallthru
        _
    $region6: #{tpu_custom_call.1} parent=1 // loop_footer
      %s23 = sadd.s32 1, %s19
    $region7: #{tpu_custom_call.1} parent=1 // loop_footer_branch
      %18 = sbr.rel target = $region3
    $region8: #{tpu_custom_call.1} parent=1 // loop_exit
      _
    %525 = vsyncpa [#allocation3], 1
    %s526 = scalar_lea.sflag [#allocation3], 1
    %527 = vsyncpa %s526, 1
    %528 = vsyncpa [#allocation6], 1
    %s529 = scalar_lea.sflag [#allocation6], 1
    %530 = vsyncpa %s529, 1
    %531 = vsyncpa [#allocation4], 1
    %s532 = scalar_lea.sflag [#allocation4], 1
    %533 = vsyncpa %s532, 1

</llo_original>
